<compile_context>
chip_gen: v7x
topology: tpu7x:2x2x1
jax: 0.10.0
libtpu: 0.0.40
codegen_flags: <defaults>
</compile_context>

<pallas_src>
import jax
import jax.numpy as jnp
from jax.experimental import pallas as pl
from jax.experimental.pallas import tpu as pltpu


def _bpr_loss_kernel(pos_ref, neg_ref, out_ref):
    x = pos_ref[...].astype(jnp.float32) - neg_ref[...].astype(jnp.float32)
    # Numerically stable: -logsigmoid(x) = softplus(-x)
    #                    = max(-x, 0) + log1p(exp(-|x|))
    neg_logsig = jnp.maximum(-x, 0.0) + jnp.log1p(jnp.exp(-jnp.abs(x)))
    tr, w = neg_logsig.shape
    # Fold the sublane-group axis and reduce it with plain VPU adds; keep an
    # (8, W) lane-dense partial so no cross-lane reduce happens per step.
    partial = neg_logsig.reshape(tr // 8, 8, w).sum(axis=0)
    out_ref[...] = partial[None]


def bpr_loss(positive_preds: jax.Array, negative_preds: jax.Array,
             *, lane_width: int = 512,
             target_block_bytes: int = 2 * 1024 * 1024) -> jax.Array:
    """Scalar BPR loss = mean(-logsigmoid(pos - neg)). Any shape/dtype."""
    assert positive_preds.shape == negative_preds.shape
    total = positive_preds.size
    dtype = positive_preds.dtype
    itemsize = jnp.dtype(dtype).itemsize

    W = lane_width                                   # multiple of 128
    rows_needed = pl.cdiv(total, W)
    rows_needed = ((rows_needed + 7) // 8) * 8       # sublane multiple
    # Row-tile from the per-input-block VMEM budget (multiple of 8 sublanes).
    target_rows = max(8, (target_block_bytes // (W * itemsize)) // 8 * 8)
    tile_rows = min(target_rows, rows_needed)
    grid = pl.cdiv(total, tile_rows * W)
    padded_total = grid * tile_rows * W

    pos_flat = positive_preds.reshape(-1)
    neg_flat = negative_preds.reshape(-1)
    pad = padded_total - total
    if pad:
        # pos=+1e4, neg=0  ->  softplus(-1e4) == 0.0 exactly in f32, so the
        # padded tail contributes nothing to the sum.
        pos_flat = jnp.pad(pos_flat, (0, pad),
                           constant_values=jnp.asarray(1e4, dtype=dtype))
        neg_flat = jnp.pad(neg_flat, (0, pad),
                           constant_values=jnp.asarray(0, dtype=dtype))
    pos2d = pos_flat.reshape(grid * tile_rows, W)
    neg2d = neg_flat.reshape(grid * tile_rows, W)

    partials = pl.pallas_call(
        _bpr_loss_kernel,
        out_shape=jax.ShapeDtypeStruct((grid, 8, W), jnp.float32),
        grid_spec=pltpu.PrefetchScalarGridSpec(
            num_scalar_prefetch=0,
            grid=(grid,),
            in_specs=[
                pl.BlockSpec((tile_rows, W), lambda i: (i, 0)),
                pl.BlockSpec((tile_rows, W), lambda i: (i, 0)),
            ],
            out_specs=pl.BlockSpec((1, 8, W), lambda i: (i, 0, 0)),
        ),
        compiler_params=pltpu.CompilerParams(
            dimension_semantics=("parallel",),
            vmem_limit_bytes=32 * 1024 * 1024,
        ),
    )(pos2d, neg2d)

    # Tiny final reduce + mean normalization (divide by the true element
    # count; padded elements contribute exactly zero).
    return jnp.sum(partials) / jnp.float32(total)


if __name__ == "__main__":
    key = jax.random.PRNGKey(0)
    k0, k1, k2, k3 = jax.random.split(key, 4)

    # Small case matching the module's forward (B, N) score matrices.
    B, N = 16, 256
    pos = jax.random.normal(k0, (B, N), dtype=jnp.float32)
    neg = jax.random.normal(k1, (B, N), dtype=jnp.float32)
    loss = bpr_loss(pos, neg)
    jax.block_until_ready(loss)
    ref = jnp.mean(-jax.nn.log_sigmoid(pos - neg))
    assert jnp.allclose(loss, ref, rtol=1e-5, atol=1e-5), (loss, ref)

    # Ragged shape exercising the padded-tail path.
    pos2 = jax.random.normal(k2, (7, 130), dtype=jnp.float32)
    neg2 = jax.random.normal(k3, (7, 130), dtype=jnp.float32)
    loss2 = bpr_loss(pos2, neg2)
    jax.block_until_ready(loss2)
    ref2 = jnp.mean(-jax.nn.log_sigmoid(pos2 - neg2))
    assert jnp.allclose(loss2, ref2, rtol=1e-5, atol=1e-5), (loss2, ref2)

    # bf16 inputs (halved HBM read bytes; f32 math inside the kernel).
    pos3 = pos.astype(jnp.bfloat16)
    neg3 = neg.astype(jnp.bfloat16)
    loss3 = bpr_loss(pos3, neg3)
    jax.block_until_ready(loss3)
    ref3 = jnp.mean(-jax.nn.log_sigmoid(
        pos3.astype(jnp.float32) - neg3.astype(jnp.float32)))
    assert jnp.allclose(loss3, ref3, rtol=1e-2, atol=1e-2), (loss3, ref3)

    print("KERNEL_OK")
</pallas_src>

<mosaic_0001>
module attributes {stable_mosaic.version = 11 : i64} {
  func.func @_bpr_loss_kernel(%arg0: i32, %arg1: memref<8x512xf32, #tpu.memory_space<vmem>>, %arg2: memref<8x512xf32, #tpu.memory_space<vmem>>, %arg3: memref<1x8x512xf32, #tpu.memory_space<vmem>>) attributes {dimension_semantics = [#tpu.dimension_semantics<parallel>], iteration_bounds = array<i64: 1>, scalar_prefetch = 0 : i64, scratch_operands = 0 : i64, tpu.core_type = #tpu.core_type<tc>, window_params = [{transform_indices = @transform_0, window_bounds = array<i64: 8, 512>}, {transform_indices = @transform_1, window_bounds = array<i64: 8, 512>}, {transform_indices = @transform_2, window_bounds = array<i64: 1, 8, 512>}]} {
    %c0 = arith.constant 0 : index
    %c0_0 = arith.constant 0 : index
    %0 = vector.load %arg1[%c0, %c0_0] : memref<8x512xf32, #tpu.memory_space<vmem>>, vector<8x512xf32>
    %c0_1 = arith.constant 0 : index
    %c0_2 = arith.constant 0 : index
    %1 = vector.load %arg2[%c0_1, %c0_2] : memref<8x512xf32, #tpu.memory_space<vmem>>, vector<8x512xf32>
    %2 = arith.subf %0, %1 : vector<8x512xf32>
    %cst = arith.constant 0.000000e+00 : f32
    %3 = vector.broadcast %cst : f32 to vector<8x512xf32>
    %4 = arith.subf %3, %2 : vector<8x512xf32>
    %cst_3 = arith.constant 0.000000e+00 : f32
    %5 = vector.broadcast %cst_3 : f32 to vector<8x512xf32>
    %6 = arith.maximumf %4, %5 : vector<8x512xf32>
    %7 = math.absf %2 : vector<8x512xf32>
    %cst_4 = arith.constant 0.000000e+00 : f32
    %8 = vector.broadcast %cst_4 : f32 to vector<8x512xf32>
    %9 = arith.subf %8, %7 : vector<8x512xf32>
    %10 = math.exp %9 : vector<8x512xf32>
    %11 = math.log1p %10 : vector<8x512xf32>
    %12 = arith.addf %6, %11 : vector<8x512xf32>
    %13 = vector.shape_cast %12 : vector<8x512xf32> to vector<1x8x512xf32>
    %cst_5 = arith.constant dense<0.000000e+00> : vector<8x512xf32>
    %14 = vector.multi_reduction <add>, %13, %cst_5 [0] : vector<1x8x512xf32> to vector<8x512xf32>
    %15 = vector.shape_cast %14 : vector<8x512xf32> to vector<1x8x512xf32>
    %c0_6 = arith.constant 0 : index
    %c0_7 = arith.constant 0 : index
    %c0_8 = arith.constant 0 : index
    %16 = vector.load %arg3[%c0_6, %c0_7, %c0_8] : memref<1x8x512xf32, #tpu.memory_space<vmem>>, vector<1x8x512xf32>
    tpu.vector_store %arg3[%c0_6, %c0_7, %c0_8], %15 {strides = array<i32>} : memref<1x8x512xf32, #tpu.memory_space<vmem>>, vector<1x8x512xf32>,
    return
  }
  func.func @transform_0(%arg0: i32) -> (i32, i32) {
    %c0_i32 = arith.constant 0 : i32
    %c0_i32_0 = arith.constant 0 : i32
    return %arg0, %c0_i32 : i32, i32
  }
  func.func @transform_1(%arg0: i32) -> (i32, i32) {
    %c0_i32 = arith.constant 0 : i32
    %c0_i32_0 = arith.constant 0 : i32
    return %arg0, %c0_i32 : i32, i32
  }
  func.func @transform_2(%arg0: i32) -> (i32, i32, i32) {
    %c0_i32 = arith.constant 0 : i32
    %c0_i32_0 = arith.constant 0 : i32
    %c0_i32_1 = arith.constant 0 : i32
    return %arg0, %c0_i32, %c0_i32_0 : i32, i32, i32
  }
}

</mosaic_0001>

<llo_original>
// kernel: tpu_custom_call.1
$region0: #{tpu_custom_call.1}
  #allocation0 [shape = 'u32[]', space=smem, size = 0x4, offset = 0x4, fixed_abs, tag = 'smem constant byte address 0x4 - core index']
  #allocation1 [shape = 'u32[144,128]{1,0:T(1,128)}', space=vmem, size = 0x12000, scoped, tag = 'internal scratch']
  %s0 = inlined_call_operand.hbm [shape: f32[8,512], index: 0, kind: input, shape index: {}]
  %s1 = inlined_call_operand.hbm [shape: f32[8,512], index: 1, kind: input, shape index: {}]
  %s2 = inlined_call_operand.hbm [shape: f32[1,8,512], index: 2, kind: output, shape index: {}]
  %s3 = sld [smem:[#allocation0]]
  $region26: #{tpu_custom_call.1} parent=0
    _
  %s5 = ssub.s32 1, %s3
  %s6 = scalar_select 0, %s5, %s3
  $region1: #{tpu_custom_call.1} parent=0
    #allocation2 [shape = 'u8[16384]{0}', space=vmem, size = 0x4000, scoped, tag = 'input window, operand 0, single buffered']
    #allocation3 [shape = 's32[1]{0}', space=sflag, size = 0x4, scoped, tag = 'scoped memory for tpu_custom_call.1']
    #allocation4 [shape = 's32[1]{0}', space=sflag, size = 0x4, scoped, tag = 'scoped memory for tpu_custom_call.1']
    #allocation5 [shape = 'u8[16384]{0}', space=vmem, size = 0x4000, scoped, tag = 'input window, operand 1, single buffered']
    #allocation6 [shape = 's32[1]{0}', space=sflag, size = 0x4, scoped, tag = 'scoped memory for tpu_custom_call.1']
    #allocation7 [shape = 'u8[16384]{0}', space=vmem, size = 0x4000, scoped, tag = 'output window, operand 0, single buffered']
    %7 = vsyncpa [#allocation3], 0
    %8 = vsyncpa [#allocation6], 0
    %9 = vsyncpa [#allocation4], 0
    // Predicated region
    $region2: #{tpu_custom_call.1} parent=1 // pred_check
      _
    $region3: #{tpu_custom_call.1} parent=1 // pred_check_branch
      %11 = sbr.rel (0) target = $region5
    $region4: #{tpu_custom_call.1} parent=1 // pred_region
      %s13 = ssub.s32 512, 512
      %14 = vsyncadd [#allocation3], %s13
      %s16 = sshll.u32 [#allocation2], 4
      %s17 = int_to_ptr.vmem [resolvable:$true] %s16
      %19 = dma.hbm_to_vmem [thread:$0]  %s0, 512, %s17, [#allocation3]
    $region5: #{tpu_custom_call.1} parent=1 // pred_fallthru
      _
    // Predicated region
    $region6: #{tpu_custom_call.1} parent=1 // pred_check
      _
    $region7: #{tpu_custom_call.1} parent=1 // pred_check_branch
      %21 = sbr.rel (0) target = $region9
    $region8: #{tpu_custom_call.1} parent=1 // pred_region
      %s23 = ssub.s32 512, 512
      %24 = vsyncadd [#allocation6], %s23
      %s26 = sshll.u32 [#allocation5], 4
      %s27 = int_to_ptr.vmem [resolvable:$true] %s26
      %29 = dma.hbm_to_vmem [thread:$0]  %s1, 512, %s27, [#allocation6]
    $region9: #{tpu_custom_call.1} parent=1 // pred_fallthru
      _
    // Predicated region
    $region10: #{tpu_custom_call.1} parent=1 // pred_check
      _
    $region11: #{tpu_custom_call.1} parent=1 // pred_check_branch
      %31 = sbr.rel (0) target = $region13
    $region12: #{tpu_custom_call.1} parent=1 // pred_region
      %32 = dma.done [#allocation3], 512
    $region13: #{tpu_custom_call.1} parent=1 // pred_fallthru
      _
    // Predicated region
    $region14: #{tpu_custom_call.1} parent=1 // pred_check
      _
    $region15: #{tpu_custom_call.1} parent=1 // pred_check_branch
      %34 = sbr.rel (0) target = $region17
    $region16: #{tpu_custom_call.1} parent=1 // pred_region
      %35 = dma.done [#allocation6], 512
    $region17: #{tpu_custom_call.1} parent=1 // pred_fallthru
      _
    %v36 = vld [vmem:[#allocation2] sm:$0xff]
    %v37 = vld [vmem:[#allocation2 + $0x8] sm:$0xff]
    %v38 = vld [vmem:[#allocation2 + $0x10] sm:$0xff]
    %v39 = vld [vmem:[#allocation2 + $0x18] sm:$0xff]
    %v40 = vld [vmem:[#allocation5] sm:$0xff]
    %v41 = vld [vmem:[#allocation5 + $0x8] sm:$0xff]
    %v42 = vld [vmem:[#allocation5 + $0x10] sm:$0xff]
    %v43 = vld [vmem:[#allocation5 + $0x18] sm:$0xff]
    %v44 = vsub.f32 %v36, %v40
    %v45 = vsub.f32 %v37, %v41
    %v46 = vsub.f32 %v38, %v42
    %v47 = vsub.f32 %v39, %v43
    %v48 = vsub.f32 0.0, %v44
    %v49 = vsub.f32 0.0, %v45
    %v50 = vsub.f32 0.0, %v46
    %v51 = vsub.f32 0.0, %v47
    %v52 = vmax.f32 %v48, 0.0
    %v53 = vmax.f32 %v49, 0.0
    %v54 = vmax.f32 %v50, 0.0
    %v55 = vmax.f32 %v51, 0.0
    %v56 = vand.u32 2147483647, %v44
    %v57 = vand.u32 2147483647, %v45
    %v58 = vand.u32 2147483647, %v46
    %v59 = vand.u32 2147483647, %v47
    %v60 = vsub.f32 0.0, %v56
    %v61 = vsub.f32 0.0, %v57
    %v62 = vsub.f32 0.0, %v58
    %v63 = vsub.f32 0.0, %v59
    %v64 = vmul.f32 %v60, 1.442695
    %v65 = vpow.pop %v64
    %v66 = vmul.f32 %v61, 1.442695
    %v67 = vpow.pop %v66
    %v68 = vmul.f32 %v62, 1.442695
    %v69 = vpow.pop %v68
    %v70 = vmul.f32 %v63, 1.442695
    %v71 = vpow.pop %v70
    %v72 = vadd.f32 %v65, 1.0
    %v73 = vlog2.pop %v72
    %v74 = vmul.f32 %v73, 0.6931472
    %v75 = vmul.f32 -0.5, %v65
    %v76 = vadd.f32 %v75, 1.0
    %v77 = vmul.f32 %v76, %v65
    %v78 = vand.u32 2147483647, %v65
    %vm79 = vcmp.lt.f32.partialorder %v78, 0.0004427343
    %v80 = vsel %vm79, %v77, %v74
    %v81 = vadd.f32 %v67, 1.0
    %v82 = vlog2.pop %v81
    %v83 = vmul.f32 %v82, 0.6931472
    %v84 = vmul.f32 -0.5, %v67
    %v85 = vadd.f32 %v84, 1.0
    %v86 = vmul.f32 %v85, %v67
    %v87 = vand.u32 2147483647, %v67
    %vm88 = vcmp.lt.f32.partialorder %v87, 0.0004427343
    %v89 = vsel %vm88, %v86, %v83
    %v90 = vadd.f32 %v69, 1.0
    %v91 = vlog2.pop %v90
    %v92 = vmul.f32 %v91, 0.6931472
    %v93 = vmul.f32 -0.5, %v69
    %v94 = vadd.f32 %v93, 1.0
    %v95 = vmul.f32 %v94, %v69
    %v96 = vand.u32 2147483647, %v69
    %vm97 = vcmp.lt.f32.partialorder %v96, 0.0004427343
    %v98 = vsel %vm97, %v95, %v92
    %v99 = vadd.f32 %v71, 1.0
    %v100 = vlog2.pop %v99
    %v101 = vmul.f32 %v100, 0.6931472
    %v102 = vmul.f32 -0.5, %v71
    %v103 = vadd.f32 %v102, 1.0
    %v104 = vmul.f32 %v103, %v71
    %v105 = vand.u32 2147483647, %v71
    %vm106 = vcmp.lt.f32.partialorder %v105, 0.0004427343
    %v107 = vsel %vm106, %v104, %v101
    %v108 = vadd.f32 %v52, %v80
    %v109 = vadd.f32 %v53, %v89
    %v110 = vadd.f32 %v54, %v98
    %v111 = vadd.f32 %v55, %v107
    %v112 = vadd.f32 %v108, 0.0
    %v113 = vadd.f32 %v109, 0.0
    %v114 = vadd.f32 %v110, 0.0
    %v115 = vadd.f32 %v111, 0.0
    %116 = vst [vmem:[#allocation7] sm:$0xff] %v112
    %117 = vst [vmem:[#allocation7 + $0x8] sm:$0xff] %v113
    %118 = vst [vmem:[#allocation7 + $0x10] sm:$0xff] %v114
    %119 = vst [vmem:[#allocation7 + $0x18] sm:$0xff] %v115
    // Predicated region
    $region18: #{tpu_custom_call.1} parent=1 // pred_check
      _
    $region19: #{tpu_custom_call.1} parent=1 // pred_check_branch
      %121 = sbr.rel (0) target = $region21
    $region20: #{tpu_custom_call.1} parent=1 // pred_region
      %s123 = ssub.s32 512, 512
      %124 = vsyncadd [#allocation4], %s123
      %s126 = sshll.u32 [#allocation7], 4
      %s127 = int_to_ptr.vmem [resolvable:$true] %s126
      %129 = dma.vmem_to_hbm [thread:$0]  %s127, 512, %s2, [#allocation4]
    $region21: #{tpu_custom_call.1} parent=1 // pred_fallthru
      _
    // Predicated region
    $region22: #{tpu_custom_call.1} parent=1 // pred_check
      _
    $region23: #{tpu_custom_call.1} parent=1 // pred_check_branch
      %131 = sbr.rel (0) target = $region25
    $region24: #{tpu_custom_call.1} parent=1 // pred_region
      %132 = dma.done [#allocation4], 512
    $region25: #{tpu_custom_call.1} parent=1 // pred_fallthru
      _
    %133 = vsyncpa [#allocation3], 1
    %134 = vsyncpa [#allocation6], 1
    %135 = vsyncpa [#allocation4], 1

</llo_original>
